<compile_context>
chip_gen: v7x
topology: tpu7x:2x2x1
jax: 0.10.0
libtpu: 0.0.40
codegen_flags: <defaults>
</compile_context>

<pallas_src>
import functools

import jax
import jax.numpy as jnp
import numpy as np
from jax.experimental import pallas as pl
from jax.experimental.pallas import tpu as pltpu


def _clone_head_kernel(x_ref, w1_ref, b1_ref, w2_ref, b2_ref, out_ref):
    """Classification head for TILE_P code pairs: dense -> tanh -> out_proj -> softmax.

    x_ref : (TILE_P, 2H)   gathered eos-row pairs [va | vb]
    w1_ref: (2H, H)        dense weight            b1_ref: (1, H)
    w2_ref: (H, 128)       out_proj weight, class dim zero-padded to 128 lanes
    b2_ref: (1, 128)       out_proj bias, padded lanes filled with -1e30
    out   : (TILE_P, 128)  softmax probs (only lanes [:2] are meaningful)
    """
    # (TILE_P, 2H) @ (2H, H): single MXU pass, f32 accumulation.
    h = jnp.tanh(
        jnp.dot(x_ref[...], w1_ref[...], preferred_element_type=jnp.float32)
        + b1_ref[...].astype(jnp.float32)
    )                                                           # (TILE_P, H) f32
    # (TILE_P, H) @ (H, 128): N padded to a full lane width.  Padded columns of
    # w2 are zero and their bias is -1e30, so their softmax weight underflows
    # to exactly 0 — no in-kernel masking needed.
    logits = (
        jnp.dot(h.astype(w2_ref.dtype), w2_ref[...],
                preferred_element_type=jnp.float32)
        + b2_ref[...].astype(jnp.float32)
    )                                                           # (TILE_P, 128) f32

    # softmax over the (padded) class dim — matches F.softmax(dim=1) on the
    # real 2 classes because padded lanes contribute exp(-1e30 - m) == 0.
    m = jnp.max(logits, axis=-1, keepdims=True)
    e = jnp.exp(logits - m)
    denom = jnp.sum(e, axis=-1, keepdims=True)
    # approx=True would route the divide to the EUP slot; kept exact to hold
    # the 1e-5 test tolerance (switch on for production).
    probs = e * pl.reciprocal(denom, approx=False)
    out_ref[...] = probs.astype(out_ref.dtype)                  # lane-dense store


def clone_detection_head(x_pairs, w1, b1, w2, b2, *, tile_p=128, n_pad=128):
    """(num_pairs, 2H) gathered eos rows -> (num_pairs, 2) softmax probs."""
    num_pairs, two_h = x_pairs.shape
    h = two_h // 2
    num_classes = w2.shape[-1]

    # Pad the pair dim up to a multiple of TILE_P (padded rows are sliced off).
    p_pad = pl.cdiv(num_pairs, tile_p) * tile_p
    if p_pad != num_pairs:
        x_pairs = jnp.pad(x_pairs, ((0, p_pad - num_pairs), (0, 0)))

    # Pad the class dim to a full 128-lane width: zero weight columns, -1e30
    # bias so the padded logits drop out of the softmax exactly.
    w2_pad = jnp.pad(w2, ((0, 0), (0, n_pad - num_classes)))
    b2_pad = jnp.pad(b2.reshape(1, num_classes),
                     ((0, 0), (0, n_pad - num_classes)),
                     constant_values=-1e30)
    b1_2d = b1.reshape(1, h)

    grid = (p_pad // tile_p,)
    grid_spec = pltpu.PrefetchScalarGridSpec(
        num_scalar_prefetch=0,
        grid=grid,
        in_specs=[
            pl.BlockSpec((tile_p, two_h), lambda p: (p, 0)),    # activations, streamed
            pl.BlockSpec((two_h, h), lambda p: (0, 0)),         # w1, resident
            pl.BlockSpec((1, h), lambda p: (0, 0)),             # b1
            pl.BlockSpec((h, n_pad), lambda p: (0, 0)),         # w2 (lane-padded)
            pl.BlockSpec((1, n_pad), lambda p: (0, 0)),         # b2 (lane-padded)
        ],
        out_specs=pl.BlockSpec((tile_p, n_pad), lambda p: (p, 0)),
    )

    out = pl.pallas_call(
        _clone_head_kernel,
        out_shape=jax.ShapeDtypeStruct((p_pad, n_pad), jnp.float32),
        grid_spec=grid_spec,
        compiler_params=pltpu.CompilerParams(
            dimension_semantics=("parallel",)),                 # v7x 2-TC sharding
    )(x_pairs, w1, b1_2d, w2_pad, b2_pad)
    return out[:num_pairs, :num_classes]


def clone_detection_bcb_forward(input_ids, params, *, max_source_length, eos_id):
    """Full forward: view(-1, L) -> encoder stand-in -> eos gather -> head -> softmax."""
    ids = input_ids.reshape(-1, max_source_length)              # (B, S)
    B, S = ids.shape
    assert B % 2 == 0, "input_ids must hold an even number of sequences (code pairs)"

    # Mirror the module's ValueError on concrete inputs (host-side check; skipped
    # when `ids` is a tracer, e.g. under jit).
    if not isinstance(ids, jax.core.Tracer):
        counts = (np.asarray(jax.device_get(ids)) == eos_id).sum(axis=1)
        if len(np.unique(counts)) > 1 or counts[0] < 1:
            raise ValueError("All examples must have the same number of <eos> tokens.")

    # TODO(synk): the injected T5 encoder (outputs['decoder_hidden_states'][-1]) has no
    # self-contained Pallas equivalent here; replaced by a deterministic embedding lookup.
    hidden_states = params["embed"][ids]                        # (B, S, H)

    # get_t5_vec tail: last-<eos> position per sequence; gather done in XLA so
    # the kernel receives one dense (num_pairs, 2H) activation slab.
    pos = jnp.arange(S, dtype=jnp.int32)[None, :]
    last_idx = jnp.max(jnp.where(ids == eos_id, pos, -1), axis=1)   # (B,)
    last_idx = jnp.mod(last_idx, S)       # safeguard for traced no-<eos> rows (-1 -> S-1)
    vec = hidden_states[jnp.arange(B), last_idx, :]             # (B, H)
    x_pairs = vec.reshape(B // 2, 2 * vec.shape[-1])            # (B//2, 2H), free reshape

    # For bf16 encoder outputs, pass bf16 activations/weights straight through:
    # the kernel accumulates in f32 via preferred_element_type.
    return clone_detection_head(
        x_pairs, params["w1"], params["b1"], params["w2"], params["b2"])


def _reference_forward(input_ids, params, *, max_source_length, eos_id):
    """Pure-jnp reference mirroring the PyTorch semantics."""
    ids = input_ids.reshape(-1, max_source_length)
    hs = params["embed"][ids]                                   # (B, S, H)
    B, S, H = hs.shape
    pos = jnp.arange(S)[None, :]
    last_idx = jnp.max(jnp.where(ids == eos_id, pos, -1), axis=1)
    vec = hs[jnp.arange(B), last_idx, :]                        # (B, H)
    x = vec.reshape(B // 2, 2 * H)
    h = jnp.tanh(x @ params["w1"] + params["b1"])
    logits = h @ params["w2"] + params["b2"]
    return jax.nn.softmax(logits, axis=-1)


if __name__ == "__main__":
    # Small, forward-consistent shapes.
    max_source_length = 8      # S
    hidden_size = 32           # H (config.hidden_size)
    vocab_size = 16
    pad_id, eos_id = 0, 2

    # input_ids: (batch=2, 2*max_source_length) — each row holds a pair of code
    # snippets; .view(-1, L) yields B = 4 sequences (2 pairs).
    input_ids = jnp.array(
        [
            [5, 7, 3, 2, pad_id, pad_id, pad_id, pad_id,        # pair 0, snippet A (eos@3)
             6, 4, 9, 8, 2, pad_id, pad_id, pad_id],            # pair 0, snippet B (eos@4)
            [3, 3, 5, 2, pad_id, pad_id, pad_id, pad_id,        # pair 1, snippet A (eos@3)
             10, 11, 12, 13, 14, 2, pad_id, pad_id],            # pair 1, snippet B (eos@5)
        ],
        dtype=jnp.int32,
    )

    # Deterministic synthetic parameters.
    key = jax.random.PRNGKey(0)
    k_emb, k_w1, k_b1, k_w2, k_b2 = jax.random.split(key, 5)
    params = {
        "embed": jax.random.normal(k_emb, (vocab_size, hidden_size), jnp.float32) * 0.02,
        "w1": jax.random.normal(k_w1, (2 * hidden_size, hidden_size), jnp.float32) * 0.05,
        "b1": jax.random.normal(k_b1, (hidden_size,), jnp.float32) * 0.01,
        "w2": jax.random.normal(k_w2, (hidden_size, 2), jnp.float32) * 0.05,
        "b2": jax.random.normal(k_b2, (2,), jnp.float32) * 0.01,
    }

    prob = clone_detection_bcb_forward(
        input_ids, params, max_source_length=max_source_length, eos_id=eos_id
    )
    prob = jax.block_until_ready(prob)

    ref = _reference_forward(
        input_ids, params, max_source_length=max_source_length, eos_id=eos_id
    )
    np.testing.assert_allclose(np.asarray(prob), np.asarray(ref), rtol=1e-5, atol=1e-5)
    assert prob.shape == (2, 2)

    print("KERNEL_OK")
</pallas_src>

<mosaic_0001>
module attributes {stable_mosaic.version = 11 : i64} {
  func.func @_clone_head_kernel(%arg0: i32, %arg1: memref<128x64xf32, #tpu.memory_space<vmem>>, %arg2: memref<64x32xf32, #tpu.memory_space<vmem>>, %arg3: memref<1x32xf32, #tpu.memory_space<vmem>>, %arg4: memref<32x128xf32, #tpu.memory_space<vmem>>, %arg5: memref<1x128xf32, #tpu.memory_space<vmem>>, %arg6: memref<128x128xf32, #tpu.memory_space<vmem>>) attributes {dimension_semantics = [#tpu.dimension_semantics<parallel>], iteration_bounds = array<i64: 1>, scalar_prefetch = 0 : i64, scratch_operands = 0 : i64, tpu.core_type = #tpu.core_type<tc>, window_params = [{transform_indices = @transform_0, window_bounds = array<i64: 128, 64>}, {pipeline_mode = #tpu.pipeline_mode<synchronous>, transform_indices = @transform_1, window_bounds = array<i64: 64, 32>}, {pipeline_mode = #tpu.pipeline_mode<synchronous>, transform_indices = @transform_2, window_bounds = array<i64: 1, 32>}, {pipeline_mode = #tpu.pipeline_mode<synchronous>, transform_indices = @transform_3, window_bounds = array<i64: 32, 128>}, {pipeline_mode = #tpu.pipeline_mode<synchronous>, transform_indices = @transform_4, window_bounds = array<i64: 1, 128>}, {transform_indices = @transform_5, window_bounds = array<i64: 128, 128>}]} {
    %c0 = arith.constant 0 : index
    %c0_0 = arith.constant 0 : index
    %0 = vector.load %arg1[%c0, %c0_0] : memref<128x64xf32, #tpu.memory_space<vmem>>, vector<128x64xf32>
    %c0_1 = arith.constant 0 : index
    %c0_2 = arith.constant 0 : index
    %1 = vector.load %arg2[%c0_1, %c0_2] : memref<64x32xf32, #tpu.memory_space<vmem>>, vector<64x32xf32>
    %cst = arith.constant dense<0.000000e+00> : vector<128x32xf32>
    %2 = tpu.matmul %0, %1, %cst {dimension_numbers = #tpu.dot_dimension_numbers<[1], [0], [0], [1], [0, 0, 1, 1], [], []>} : vector<128x64xf32>, vector<64x32xf32>, vector<128x32xf32> -> vector<128x32xf32>
    %c0_3 = arith.constant 0 : index
    %c0_4 = arith.constant 0 : index
    %3 = vector.load %arg3[%c0_3, %c0_4] : memref<1x32xf32, #tpu.memory_space<vmem>>, vector<1x32xf32>
    %4 = vector.broadcast %3 : vector<1x32xf32> to vector<128x32xf32>
    %5 = arith.addf %2, %4 : vector<128x32xf32>
    %6 = math.tanh %5 : vector<128x32xf32>
    %c0_5 = arith.constant 0 : index
    %c0_6 = arith.constant 0 : index
    %7 = vector.load %arg4[%c0_5, %c0_6] : memref<32x128xf32, #tpu.memory_space<vmem>>, vector<32x128xf32>
    %cst_7 = arith.constant dense<0.000000e+00> : vector<128x128xf32>
    %8 = tpu.matmul %6, %7, %cst_7 {dimension_numbers = #tpu.dot_dimension_numbers<[1], [0], [0], [1], [0, 0, 1, 1], [], []>} : vector<128x32xf32>, vector<32x128xf32>, vector<128x128xf32> -> vector<128x128xf32>
    %c0_8 = arith.constant 0 : index
    %c0_9 = arith.constant 0 : index
    %9 = vector.load %arg5[%c0_8, %c0_9] : memref<1x128xf32, #tpu.memory_space<vmem>>, vector<1x128xf32>
    %10 = vector.broadcast %9 : vector<1x128xf32> to vector<128x128xf32>
    %11 = arith.addf %8, %10 : vector<128x128xf32>
    %cst_10 = arith.constant dense<0xFF800000> : vector<128xf32>
    %12 = vector.multi_reduction <maximumf>, %11, %cst_10 [1] : vector<128x128xf32> to vector<128xf32>
    %13 = vector.shape_cast %12 : vector<128xf32> to vector<128x1xf32>
    %14 = vector.broadcast %13 : vector<128x1xf32> to vector<128x128xf32>
    %15 = arith.subf %11, %14 : vector<128x128xf32>
    %16 = math.exp %15 : vector<128x128xf32>
    %cst_11 = arith.constant dense<0.000000e+00> : vector<128xf32>
    %17 = vector.multi_reduction <add>, %16, %cst_11 [1] : vector<128x128xf32> to vector<128xf32>
    %18 = vector.shape_cast %17 : vector<128xf32> to vector<128x1xf32>
    %19 = tpu.reciprocal %18 : vector<128x1xf32> -> vector<128x1xf32>
    %20 = vector.broadcast %19 : vector<128x1xf32> to vector<128x128xf32>
    %21 = arith.mulf %16, %20 : vector<128x128xf32>
    %c0_12 = arith.constant 0 : index
    %c0_13 = arith.constant 0 : index
    %22 = vector.load %arg6[%c0_12, %c0_13] : memref<128x128xf32, #tpu.memory_space<vmem>>, vector<128x128xf32>
    tpu.vector_store %arg6[%c0_12, %c0_13], %21 {strides = array<i32>} : memref<128x128xf32, #tpu.memory_space<vmem>>, vector<128x128xf32>,
    return
  }
  func.func @transform_0(%arg0: i32) -> (i32, i32) {
    %c0_i32 = arith.constant 0 : i32
    %c0_i32_0 = arith.constant 0 : i32
    return %arg0, %c0_i32 : i32, i32
  }
  func.func @transform_1(%arg0: i32) -> (i32, i32) {
    %c0_i32 = arith.constant 0 : i32
    %c0_i32_0 = arith.constant 0 : i32
    %c0_i32_1 = arith.constant 0 : i32
    return %c0_i32, %c0_i32_0 : i32, i32
  }
  func.func @transform_2(%arg0: i32) -> (i32, i32) {
    %c0_i32 = arith.constant 0 : i32
    %c0_i32_0 = arith.constant 0 : i32
    %c0_i32_1 = arith.constant 0 : i32
    return %c0_i32, %c0_i32_0 : i32, i32
  }
  func.func @transform_3(%arg0: i32) -> (i32, i32) {
    %c0_i32 = arith.constant 0 : i32
    %c0_i32_0 = arith.constant 0 : i32
    %c0_i32_1 = arith.constant 0 : i32
    return %c0_i32, %c0_i32_0 : i32, i32
  }
  func.func @transform_4(%arg0: i32) -> (i32, i32) {
    %c0_i32 = arith.constant 0 : i32
    %c0_i32_0 = arith.constant 0 : i32
    %c0_i32_1 = arith.constant 0 : i32
    return %c0_i32, %c0_i32_0 : i32, i32
  }
  func.func @transform_5(%arg0: i32) -> (i32, i32) {
    %c0_i32 = arith.constant 0 : i32
    %c0_i32_0 = arith.constant 0 : i32
    return %arg0, %c0_i32 : i32, i32
  }
}

</mosaic_0001>

<llo_original>
// kernel: tpu_custom_call.1
$region0: #{tpu_custom_call.1}
  #allocation0 [shape = 'u32[]', space=smem, size = 0x4, offset = 0x4, fixed_abs, tag = 'smem constant byte address 0x4 - core index']
  #allocation1 [shape = 'u32[144,128]{1,0:T(1,128)}', space=vmem, size = 0x12000, scoped, tag = 'internal scratch']
  %s0 = inlined_call_operand.vmem [shape: f32[128,64], index: 0, kind: input, shape index: {}]
  %s1 = inlined_call_operand.vmem [shape: f32[64,32], index: 1, kind: input, shape index: {}]
  %s2 = inlined_call_operand.vmem [shape: f32[1,32], index: 2, kind: input, shape index: {}]
  %s3 = inlined_call_operand.vmem [shape: f32[32,128], index: 3, kind: input, shape index: {}]
  %s4 = inlined_call_operand.vmem [shape: f32[1,128], index: 4, kind: input, shape index: {}]
  %s5 = inlined_call_operand.hbm [shape: f32[128,128], index: 5, kind: output, shape index: {}]
  %s6 = sld [smem:[#allocation0]]
  $region30: #{tpu_custom_call.1} parent=0
    _
  %s8 = ssub.s32 1, %s6
  %s9 = scalar_select 0, %s8, %s6
  $region1: #{tpu_custom_call.1} parent=0
    #allocation2 [shape = 'u8[65536]{0}', space=vmem, size = 0x10000, scoped, tag = 'output window, operand 0, single buffered']
    #allocation3 [shape = 's32[1]{0}', space=sflag, size = 0x4, scoped, tag = 'scoped memory for tpu_custom_call.1']
    %10 = vsyncpa [#allocation3], 0
    // Predicated region
    $region2: #{tpu_custom_call.1} parent=1 // pred_check
      _
    $region3: #{tpu_custom_call.1} parent=1 // pred_check_branch
      %12 = sbr.rel (0) target = $region5
    $region4: #{tpu_custom_call.1} parent=1 // pred_region
      _
    $region5: #{tpu_custom_call.1} parent=1 // pred_fallthru
      _
    // Predicated region
    $region6: #{tpu_custom_call.1} parent=1 // pred_check
      _
    $region7: #{tpu_custom_call.1} parent=1 // pred_check_branch
      %14 = sbr.rel (0) target = $region9
    $region8: #{tpu_custom_call.1} parent=1 // pred_region
      _
    $region9: #{tpu_custom_call.1} parent=1 // pred_fallthru
      _
    // Predicated region
    $region10: #{tpu_custom_call.1} parent=1 // pred_check
      _
    $region11: #{tpu_custom_call.1} parent=1 // pred_check_branch
      %16 = sbr.rel (0) target = $region13
    $region12: #{tpu_custom_call.1} parent=1 // pred_region
      _
    $region13: #{tpu_custom_call.1} parent=1 // pred_fallthru
      _
    // Predicated region
    $region14: #{tpu_custom_call.1} parent=1 // pred_check
      _
    $region15: #{tpu_custom_call.1} parent=1 // pred_check_branch
      %18 = sbr.rel (0) target = $region17
    $region16: #{tpu_custom_call.1} parent=1 // pred_region
      _
    $region17: #{tpu_custom_call.1} parent=1 // pred_fallthru
      _
    // Predicated region
    $region18: #{tpu_custom_call.1} parent=1 // pred_check
      _
    $region19: #{tpu_custom_call.1} parent=1 // pred_check_branch
      %20 = sbr.rel (0) target = $region21
    $region20: #{tpu_custom_call.1} parent=1 // pred_region
      _
    $region21: #{tpu_custom_call.1} parent=1 // pred_fallthru
      _
    %v21 = vld [vmem:[%s0] sm:$0xff]
    %v22 = vld [vmem:[%s0 + $0x8] sm:$0xff]
    %v23 = vld [vmem:[%s0 + $0x10] sm:$0xff]
    %v24 = vld [vmem:[%s0 + $0x18] sm:$0xff]
    %v25 = vld [vmem:[%s0 + $0x20] sm:$0xff]
    %v26 = vld [vmem:[%s0 + $0x28] sm:$0xff]
    %v27 = vld [vmem:[%s0 + $0x30] sm:$0xff]
    %v28 = vld [vmem:[%s0 + $0x38] sm:$0xff]
    %v29 = vld [vmem:[%s0 + $0x40] sm:$0xff]
    %v30 = vld [vmem:[%s0 + $0x48] sm:$0xff]
    %v31 = vld [vmem:[%s0 + $0x50] sm:$0xff]
    %v32 = vld [vmem:[%s0 + $0x58] sm:$0xff]
    %v33 = vld [vmem:[%s0 + $0x60] sm:$0xff]
    %v34 = vld [vmem:[%s0 + $0x68] sm:$0xff]
    %v35 = vld [vmem:[%s0 + $0x70] sm:$0xff]
    %v36 = vld [vmem:[%s0 + $0x78] sm:$0xff]
    %v37 = vld [vmem:[%s1] sm:$0xff]
    %v38 = vld [vmem:[%s1 + $0x8] sm:$0xff]
    %v39 = vld [vmem:[%s1 + $0x10] sm:$0xff]
    %v40 = vld [vmem:[%s1 + $0x18] sm:$0xff]
    %v41 = vld [vmem:[%s1 + $0x20] sm:$0xff]
    %v42 = vld [vmem:[%s1 + $0x28] sm:$0xff]
    %v43 = vld [vmem:[%s1 + $0x30] sm:$0xff]
    %v44 = vld [vmem:[%s1 + $0x38] sm:$0xff]
    %v45 = vld [vmem:[%s2] sm:$0x1]
    %v47 = vlaneseq
    %v48 = vshrl.u32 %v47, 7
    %v49 = vsub.s32 0, %v48
    %v50 = vrot.slane %v45, %v49
    %vm52 = vcmask 523264
    %v54 = vsel %vm52, %v21, 0
    %v57 = vsel %vm52, %v22, 0
    %v60 = vsel %vm52, %v23, 0
    %v63 = vsel %vm52, %v24, 0
    %v66 = vsel %vm52, %v25, 0
    %v69 = vsel %vm52, %v26, 0
    %v72 = vsel %vm52, %v27, 0
    %v75 = vsel %vm52, %v28, 0
    %v78 = vsel %vm52, %v29, 0
    %v81 = vsel %vm52, %v30, 0
    %v84 = vsel %vm52, %v31, 0
    %v87 = vsel %vm52, %v32, 0
    %v90 = vsel %vm52, %v33, 0
    %v93 = vsel %vm52, %v34, 0
    %v96 = vsel %vm52, %v35, 0
    %v99 = vsel %vm52, %v36, 0
    %101 = vmatprep.subr.mxu0 0.0
    %102 = vmatpush1.msra.mxu0 %v37
    %103 = vmatprep.subr.mxu0 0.0
    %104 = vmatpush1.msra.mxu0 %v38
    %105 = vmatprep.subr.mxu0 0.0
    %106 = vmatpush1.msra.mxu0 %v39
    %107 = vmatprep.subr.mxu0 0.0
    %108 = vmatpush1.msra.mxu0 %v40
    %109 = vmatprep.subr.mxu0 0.0
    %110 = vmatpush1.msra.mxu0 %v41
    %111 = vmatprep.subr.mxu0 0.0
    %112 = vmatpush1.msra.mxu0 %v42
    %113 = vmatprep.subr.mxu0 0.0
    %114 = vmatpush1.msra.mxu0 %v43
    %115 = vmatprep.subr.mxu0 0.0
    %116 = vmatpush1.msra.mxu0 %v44
    %117 = vmatprep.subr.mxu0 0.0
    %118 = vmatpush1.msra.mxu0 0.0
    %119 = vmatprep.subr.mxu0 0.0
    %120 = vmatpush1.msra.mxu0 0.0
    %121 = vmatprep.subr.mxu0 0.0
    %122 = vmatpush1.msra.mxu0 0.0
    %123 = vmatprep.subr.mxu0 0.0
    %124 = vmatpush1.msra.mxu0 0.0
    %125 = vmatprep.subr.mxu0 0.0
    %126 = vmatpush1.msra.mxu0 0.0
    %127 = vmatprep.subr.mxu0 0.0
    %128 = vmatpush1.msra.mxu0 0.0
    %129 = vmatprep.subr.mxu0 0.0
    %130 = vmatpush1.msra.mxu0 0.0
    %131 = vmatprep.subr.mxu0 0.0
    %132 = vmatpush1.msra.mxu0 0.0
    %133 = vmatprep.subr.mxu0 0.0
    %134 = vmatpush1.msra.mxu0 0.0
    %135 = vmatprep.subr.mxu0 0.0
    %136 = vmatpush1.msra.mxu0 0.0
    %137 = vmatprep.subr.mxu0 0.0
    %138 = vmatpush1.msra.mxu0 0.0
    %139 = vmatprep.subr.mxu0 0.0
    %140 = vmatpush1.msra.mxu0 0.0
    %141 = vmatprep.subr.mxu0 0.0
    %142 = vmatpush1.msra.mxu0 0.0
    %143 = vmatprep.subr.mxu0 0.0
    %144 = vmatpush1.msra.mxu0 0.0
    %145 = vmatprep.subr.mxu0 0.0
    %146 = vmatpush1.msra.mxu0 0.0
    %147 = vmatprep.subr.mxu0 0.0
    %148 = vmatpush1.msra.mxu0 0.0
    %149 = vmatprep.subr.mxu0 0.0
    %150 = vmatpush1.msra.mxu0 0.0
    %151 = vmatprep.subr.mxu0 0.0
    %152 = vmatpush1.msra.mxu0 0.0
    %153 = vmatprep.subr.mxu0 0.0
    %154 = vmatpush1.msra.mxu0 0.0
    %155 = vmatprep.subr.mxu0 0.0
    %156 = vmatpush1.msra.mxu0 0.0
    %157 = vmatprep.subr.mxu0 0.0
    %158 = vmatpush1.msra.mxu0 0.0
    %159 = vmatprep.subr.mxu0 0.0
    %160 = vmatpush1.msra.mxu0 0.0
    %161 = vmatprep.subr.mxu0 0.0
    %162 = vmatpush1.msra.mxu0 0.0
    %163 = vmatprep.subr.mxu0 0.0
    %164 = vmatpush1.msra.mxu0 0.0
    %165 = vmatprep.mubr.f32.mxu0 0.0
    %166 = vmatmul.mubr.f32.gmra.mrb[0].mxu0 %v54
    %v167 = vpop.f32.mrb[0].mxu0
    %v168 = vadd.f32 %v50, %v167
    %v169 = vpop.f32.mrb[0].mxu0
    %170 = vmatprep.mubr.f32.mxu0 0.0
    %171 = vmatmul.mubr.f32.gmra.mrb[0].mxu0 %v57
    %v172 = vpop.f32.mrb[0].mxu0
    %v173 = vadd.f32 %v50, %v172
    %v174 = vpop.f32.mrb[0].mxu0
    %175 = vmatprep.mubr.f32.mxu0 0.0
    %176 = vmatmul.mubr.f32.gmra.mrb[0].mxu0 %v60
    %v177 = vpop.f32.mrb[0].mxu0
    %v178 = vadd.f32 %v50, %v177
    %v179 = vpop.f32.mrb[0].mxu0
    %180 = vmatprep.mubr.f32.mxu0 0.0
    %181 = vmatmul.mubr.f32.gmra.mrb[0].mxu0 %v63
    %v182 = vpop.f32.mrb[0].mxu0
    %v183 = vadd.f32 %v50, %v182
    %v184 = vpop.f32.mrb[0].mxu0
    %185 = vmatprep.mubr.f32.mxu0 0.0
    %186 = vmatmul.mubr.f32.gmra.mrb[0].mxu0 %v66
    %v187 = vpop.f32.mrb[0].mxu0
    %v188 = vadd.f32 %v50, %v187
    %v189 = vpop.f32.mrb[0].mxu0
    %190 = vmatprep.mubr.f32.mxu0 0.0
    %191 = vmatmul.mubr.f32.gmra.mrb[0].mxu0 %v69
    %v192 = vpop.f32.mrb[0].mxu0
    %v193 = vadd.f32 %v50, %v192
    %v194 = vpop.f32.mrb[0].mxu0
    %195 = vmatprep.mubr.f32.mxu0 0.0
    %196 = vmatmul.mubr.f32.gmra.mrb[0].mxu0 %v72
    %v197 = vpop.f32.mrb[0].mxu0
    %v198 = vadd.f32 %v50, %v197
    %v199 = vpop.f32.mrb[0].mxu0
    %200 = vmatprep.mubr.f32.mxu0 0.0
    %201 = vmatmul.mubr.f32.gmra.mrb[0].mxu0 %v75
    %v202 = vpop.f32.mrb[0].mxu0
    %v203 = vadd.f32 %v50, %v202
    %v204 = vpop.f32.mrb[0].mxu0
    %205 = vmatprep.mubr.f32.mxu0 0.0
    %206 = vmatmul.mubr.f32.gmra.mrb[0].mxu0 %v78
    %v207 = vpop.f32.mrb[0].mxu0
    %v208 = vadd.f32 %v50, %v207
    %v209 = vpop.f32.mrb[0].mxu0
    %210 = vmatprep.mubr.f32.mxu0 0.0
    %211 = vmatmul.mubr.f32.gmra.mrb[0].mxu0 %v81
    %v212 = vpop.f32.mrb[0].mxu0
    %v213 = vadd.f32 %v50, %v212
    %v214 = vpop.f32.mrb[0].mxu0
    %215 = vmatprep.mubr.f32.mxu0 0.0
    %216 = vmatmul.mubr.f32.gmra.mrb[0].mxu0 %v84
    %v217 = vpop.f32.mrb[0].mxu0
    %v218 = vadd.f32 %v50, %v217
    %v219 = vpop.f32.mrb[0].mxu0
    %220 = vmatprep.mubr.f32.mxu0 0.0
    %221 = vmatmul.mubr.f32.gmra.mrb[0].mxu0 %v87
    %v222 = vpop.f32.mrb[0].mxu0
    %v223 = vadd.f32 %v50, %v222
    %v224 = vpop.f32.mrb[0].mxu0
    %225 = vmatprep.mubr.f32.mxu0 0.0
    %226 = vmatmul.mubr.f32.gmra.mrb[0].mxu0 %v90
    %v227 = vpop.f32.mrb[0].mxu0
    %v228 = vadd.f32 %v50, %v227
    %v229 = vpop.f32.mrb[0].mxu0
    %230 = vmatprep.mubr.f32.mxu0 0.0
    %231 = vmatmul.mubr.f32.gmra.mrb[0].mxu0 %v93
    %v232 = vpop.f32.mrb[0].mxu0
    %v233 = vadd.f32 %v50, %v232
    %v234 = vpop.f32.mrb[0].mxu0
    %235 = vmatprep.mubr.f32.mxu0 0.0
    %236 = vmatmul.mubr.f32.gmra.mrb[0].mxu0 %v96
    %v237 = vpop.f32.mrb[0].mxu0
    %v238 = vadd.f32 %v50, %v237
    %v239 = vpop.f32.mrb[0].mxu0
    %240 = vmatprep.mubr.f32.mxu0 0.0
    %241 = vmatmul.mubr.f32.gmra.mrb[0].mxu0 %v99
    %v242 = vpop.f32.mrb[0].mxu0
    %v243 = vadd.f32 %v50, %v242
    %v244 = vpop.f32.mrb[0].mxu0
    %245 = vdwg.mxu0
    %v246 = vtanh.pop %v168
    %v247 = vtanh.pop %v173
    %v248 = vtanh.pop %v178
    %v249 = vtanh.pop %v183
    %v250 = vtanh.pop %v188
    %v251 = vtanh.pop %v193
    %v252 = vtanh.pop %v198
    %v253 = vtanh.pop %v203
    %v254 = vtanh.pop %v208
    %v255 = vtanh.pop %v213
    %v256 = vtanh.pop %v218
    %v257 = vtanh.pop %v223
    %v258 = vtanh.pop %v228
    %v259 = vtanh.pop %v233
    %v260 = vtanh.pop %v238
    %v261 = vtanh.pop %v243
    %v262 = vld [vmem:[%s3] sm:$0xff]
    %v263 = vld [vmem:[%s3 + $0x8] sm:$0xff]
    %v264 = vld [vmem:[%s3 + $0x10] sm:$0xff]
    %v265 = vld [vmem:[%s3 + $0x18] sm:$0xff]
    %v266 = vld [vmem:[%s4] sm:$0x1]
    %v268 = vlaneseq
    %v269 = vshrl.u32 %v268, 7
    %v270 = vsub.s32 0, %v269
    %v271 = vrot.slane %v266, %v270
    %vm273 = vcmask 261120
    %v275 = vsel %vm273, %v246, 0
    %v278 = vsel %vm273, %v247, 0
    %v281 = vsel %vm273, %v248, 0
    %v284 = vsel %vm273, %v249, 0
    %v287 = vsel %vm273, %v250, 0
    %v290 = vsel %vm273, %v251, 0
    %v293 = vsel %vm273, %v252, 0
    %v296 = vsel %vm273, %v253, 0
    %v299 = vsel %vm273, %v254, 0
    %v302 = vsel %vm273, %v255, 0
    %v305 = vsel %vm273, %v256, 0
    %v308 = vsel %vm273, %v257, 0
    %v311 = vsel %vm273, %v258, 0
    %v314 = vsel %vm273, %v259, 0
    %v317 = vsel %vm273, %v260, 0
    %v320 = vsel %vm273, %v261, 0
    %322 = vmatprep.subr.mxu0 0.0
    %323 = vmatpush1.msra.mxu0 %v262
    %324 = vmatprep.subr.mxu0 0.0
    %325 = vmatpush1.msra.mxu0 %v263
    %326 = vmatprep.subr.mxu0 0.0
    %327 = vmatpush1.msra.mxu0 %v264
    %328 = vmatprep.subr.mxu0 0.0
    %329 = vmatpush1.msra.mxu0 %v265
    %330 = vmatprep.subr.mxu0 0.0
    %331 = vmatpush1.msra.mxu0 0.0
    %332 = vmatprep.subr.mxu0 0.0
    %333 = vmatpush1.msra.mxu0 0.0
    %334 = vmatprep.subr.mxu0 0.0
    %335 = vmatpush1.msra.mxu0 0.0
    %336 = vmatprep.subr.mxu0 0.0
    %337 = vmatpush1.msra.mxu0 0.0
    %338 = vmatprep.subr.mxu0 0.0
    %339 = vmatpush1.msra.mxu0 0.0
    %340 = vmatprep.subr.mxu0 0.0
    %341 = vmatpush1.msra.mxu0 0.0
    %342 = vmatprep.subr.mxu0 0.0
    %343 = vmatpush1.msra.mxu0 0.0
    %344 = vmatprep.subr.mxu0 0.0
    %345 = vmatpush1.msra.mxu0 0.0
    %346 = vmatprep.subr.mxu0 0.0
    %347 = vmatpush1.msra.mxu0 0.0
    %348 = vmatprep.subr.mxu0 0.0
    %349 = vmatpush1.msra.mxu0 0.0
    %350 = vmatprep.subr.mxu0 0.0
    %351 = vmatpush1.msra.mxu0 0.0
    %352 = vmatprep.subr.mxu0 0.0
    %353 = vmatpush1.msra.mxu0 0.0
    %354 = vmatprep.subr.mxu0 0.0
    %355 = vmatpush1.msra.mxu0 0.0
    %356 = vmatprep.subr.mxu0 0.0
    %357 = vmatpush1.msra.mxu0 0.0
    %358 = vmatprep.subr.mxu0 0.0
    %359 = vmatpush1.msra.mxu0 0.0
    %360 = vmatprep.subr.mxu0 0.0
    %361 = vmatpush1.msra.mxu0 0.0
    %362 = vmatprep.subr.mxu0 0.0
    %363 = vmatpush1.msra.mxu0 0.0
    %364 = vmatprep.subr.mxu0 0.0
    %365 = vmatpush1.msra.mxu0 0.0
    %366 = vmatprep.subr.mxu0 0.0
    %367 = vmatpush1.msra.mxu0 0.0
    %368 = vmatprep.subr.mxu0 0.0
    %369 = vmatpush1.msra.mxu0 0.0
    %370 = vmatprep.subr.mxu0 0.0
    %371 = vmatpush1.msra.mxu0 0.0
    %372 = vmatprep.subr.mxu0 0.0
    %373 = vmatpush1.msra.mxu0 0.0
    %374 = vmatprep.subr.mxu0 0.0
    %375 = vmatpush1.msra.mxu0 0.0
    %376 = vmatprep.subr.mxu0 0.0
    %377 = vmatpush1.msra.mxu0 0.0
    %378 = vmatprep.subr.mxu0 0.0
    %379 = vmatpush1.msra.mxu0 0.0
    %380 = vmatprep.subr.mxu0 0.0
    %381 = vmatpush1.msra.mxu0 0.0
    %382 = vmatprep.subr.mxu0 0.0
    %383 = vmatpush1.msra.mxu0 0.0
    %384 = vmatprep.subr.mxu0 0.0
    %385 = vmatpush1.msra.mxu0 0.0
    %386 = vmatprep.mubr.f32.mxu0 0.0
    %387 = vmatmul.mubr.f32.gmra.mrb[0].mxu0 %v275
    %v388 = vpop.f32.mrb[0].mxu0
    %v389 = vadd.f32 %v271, %v388
    %v390 = vpop.f32.mrb[0].mxu0
    %391 = vmatprep.mubr.f32.mxu0 0.0
    %392 = vmatmul.mubr.f32.gmra.mrb[0].mxu0 %v278
    %v393 = vpop.f32.mrb[0].mxu0
    %v394 = vadd.f32 %v271, %v393
    %v395 = vpop.f32.mrb[0].mxu0
    %396 = vmatprep.mubr.f32.mxu0 0.0
    %397 = vmatmul.mubr.f32.gmra.mrb[0].mxu0 %v281
    %v398 = vpop.f32.mrb[0].mxu0
    %v399 = vadd.f32 %v271, %v398
    %v400 = vpop.f32.mrb[0].mxu0
    %401 = vmatprep.mubr.f32.mxu0 0.0
    %402 = vmatmul.mubr.f32.gmra.mrb[0].mxu0 %v284
    %v403 = vpop.f32.mrb[0].mxu0
    %v404 = vadd.f32 %v271, %v403
    %v405 = vpop.f32.mrb[0].mxu0
    %406 = vmatprep.mubr.f32.mxu0 0.0
    %407 = vmatmul.mubr.f32.gmra.mrb[0].mxu0 %v287
    %v408 = vpop.f32.mrb[0].mxu0
    %v409 = vadd.f32 %v271, %v408
    %v410 = vpop.f32.mrb[0].mxu0
    %411 = vmatprep.mubr.f32.mxu0 0.0
    %412 = vmatmul.mubr.f32.gmra.mrb[0].mxu0 %v290
    %v413 = vpop.f32.mrb[0].mxu0
    %v414 = vadd.f32 %v271, %v413
    %v415 = vpop.f32.mrb[0].mxu0
    %416 = vmatprep.mubr.f32.mxu0 0.0
    %417 = vmatmul.mubr.f32.gmra.mrb[0].mxu0 %v293
    %v418 = vpop.f32.mrb[0].mxu0
    %v419 = vadd.f32 %v271, %v418
    %v420 = vpop.f32.mrb[0].mxu0
    %421 = vmatprep.mubr.f32.mxu0 0.0
    %422 = vmatmul.mubr.f32.gmra.mrb[0].mxu0 %v296
    %v423 = vpop.f32.mrb[0].mxu0
    %v424 = vadd.f32 %v271, %v423
    %v425 = vpop.f32.mrb[0].mxu0
    %426 = vmatprep.mubr.f32.mxu0 0.0
    %427 = vmatmul.mubr.f32.gmra.mrb[0].mxu0 %v299
    %v428 = vpop.f32.mrb[0].mxu0
    %v429 = vadd.f32 %v271, %v428
    %v430 = vpop.f32.mrb[0].mxu0
    %431 = vmatprep.mubr.f32.mxu0 0.0
    %432 = vmatmul.mubr.f32.gmra.mrb[0].mxu0 %v302
    %v433 = vpop.f32.mrb[0].mxu0
    %v434 = vadd.f32 %v271, %v433
    %v435 = vpop.f32.mrb[0].mxu0
    %436 = vmatprep.mubr.f32.mxu0 0.0
    %437 = vmatmul.mubr.f32.gmra.mrb[0].mxu0 %v305
    %v438 = vpop.f32.mrb[0].mxu0
    %v439 = vadd.f32 %v271, %v438
    %v440 = vpop.f32.mrb[0].mxu0
    %441 = vmatprep.mubr.f32.mxu0 0.0
    %442 = vmatmul.mubr.f32.gmra.mrb[0].mxu0 %v308
    %v443 = vpop.f32.mrb[0].mxu0
    %v444 = vadd.f32 %v271, %v443
    %v445 = vpop.f32.mrb[0].mxu0
    %446 = vmatprep.mubr.f32.mxu0 0.0
    %447 = vmatmul.mubr.f32.gmra.mrb[0].mxu0 %v311
    %v448 = vpop.f32.mrb[0].mxu0
    %v449 = vadd.f32 %v271, %v448
    %v450 = vpop.f32.mrb[0].mxu0
    %451 = vmatprep.mubr.f32.mxu0 0.0
    %452 = vmatmul.mubr.f32.gmra.mrb[0].mxu0 %v314
    %v453 = vpop.f32.mrb[0].mxu0
    %v454 = vadd.f32 %v271, %v453
    %v455 = vpop.f32.mrb[0].mxu0
    %456 = vmatprep.mubr.f32.mxu0 0.0
    %457 = vmatmul.mubr.f32.gmra.mrb[0].mxu0 %v317
    %v458 = vpop.f32.mrb[0].mxu0
    %v459 = vadd.f32 %v271, %v458
    %v460 = vpop.f32.mrb[0].mxu0
    %461 = vmatprep.mubr.f32.mxu0 0.0
    %462 = vmatmul.mubr.f32.gmra.mrb[0].mxu0 %v320
    %v463 = vpop.f32.mrb[0].mxu0
    %v464 = vadd.f32 %v271, %v463
    %v465 = vpop.f32.mrb[0].mxu0
    %466 = vdwg.mxu0
    %467 = vmax.xlane.f32.xlu0 %v389
    %v468 = vpop.xlane.xlu0 %467
    %469 = vmax.xlane.f32.xlu0 %v394
    %v470 = vpop.xlane.xlu0 %469
    %471 = vmax.xlane.f32.xlu0 %v399
    %v472 = vpop.xlane.xlu0 %471
    %473 = vmax.xlane.f32.xlu0 %v404
    %v474 = vpop.xlane.xlu0 %473
    %475 = vmax.xlane.f32.xlu0 %v409
    %v476 = vpop.xlane.xlu0 %475
    %477 = vmax.xlane.f32.xlu0 %v414
    %v478 = vpop.xlane.xlu0 %477
    %479 = vmax.xlane.f32.xlu0 %v419
    %v480 = vpop.xlane.xlu0 %479
    %481 = vmax.xlane.f32.xlu0 %v424
    %v482 = vpop.xlane.xlu0 %481
    %483 = vmax.xlane.f32.xlu0 %v429
    %v484 = vpop.xlane.xlu0 %483
    %485 = vmax.xlane.f32.xlu0 %v434
    %v486 = vpop.xlane.xlu0 %485
    %487 = vmax.xlane.f32.xlu0 %v439
    %v488 = vpop.xlane.xlu0 %487
    %489 = vmax.xlane.f32.xlu0 %v444
    %v490 = vpop.xlane.xlu0 %489
    %491 = vmax.xlane.f32.xlu0 %v449
    %v492 = vpop.xlane.xlu0 %491
    %493 = vmax.xlane.f32.xlu0 %v454
    %v494 = vpop.xlane.xlu0 %493
    %495 = vmax.xlane.f32.xlu0 %v459
    %v496 = vpop.xlane.xlu0 %495
    %497 = vmax.xlane.f32.xlu0 %v464
    %v498 = vpop.xlane.xlu0 %497
    %v499 = vsub.f32 %v389, %v468
    %v500 = vsub.f32 %v394, %v470
    %v501 = vsub.f32 %v399, %v472
    %v502 = vsub.f32 %v404, %v474
    %v503 = vsub.f32 %v409, %v476
    %v504 = vsub.f32 %v414, %v478
    %v505 = vsub.f32 %v419, %v480
    %v506 = vsub.f32 %v424, %v482
    %v507 = vsub.f32 %v429, %v484
    %v508 = vsub.f32 %v434, %v486
    %v509 = vsub.f32 %v439, %v488
    %v510 = vsub.f32 %v444, %v490
    %v511 = vsub.f32 %v449, %v492
    %v512 = vsub.f32 %v454, %v494
    %v513 = vsub.f32 %v459, %v496
    %v514 = vsub.f32 %v464, %v498
    %v515 = vmul.f32 %v499, 1.442695
    %v516 = vpow.pop %v515
    %v517 = vmul.f32 %v500, 1.442695
    %v518 = vpow.pop %v517
    %v519 = vmul.f32 %v501, 1.442695
    %v520 = vpow.pop %v519
    %v521 = vmul.f32 %v502, 1.442695
    %v522 = vpow.pop %v521
    %v523 = vmul.f32 %v503, 1.442695
    %v524 = vpow.pop %v523
    %v525 = vmul.f32 %v504, 1.442695
    %v526 = vpow.pop %v525
    %v527 = vmul.f32 %v505, 1.442695
    %v528 = vpow.pop %v527
    %v529 = vmul.f32 %v506, 1.442695
    %v530 = vpow.pop %v529
    %v531 = vmul.f32 %v507, 1.442695
    %v532 = vpow.pop %v531
    %v533 = vmul.f32 %v508, 1.442695
    %v534 = vpow.pop %v533
    %v535 = vmul.f32 %v509, 1.442695
    %v536 = vpow.pop %v535
    %v537 = vmul.f32 %v510, 1.442695
    %v538 = vpow.pop %v537
    %v539 = vmul.f32 %v511, 1.442695
    %v540 = vpow.pop %v539
    %v541 = vmul.f32 %v512, 1.442695
    %v542 = vpow.pop %v541
    %v543 = vmul.f32 %v513, 1.442695
    %v544 = vpow.pop %v543
    %v545 = vmul.f32 %v514, 1.442695
    %v546 = vpow.pop %v545
    %547 = vadd.xlane.f32.xlu0 %v516
    %v548 = vpop.xlane.xlu0 %547
    %549 = vadd.xlane.f32.xlu0 %v518
    %v550 = vpop.xlane.xlu0 %549
    %551 = vadd.xlane.f32.xlu0 %v520
    %v552 = vpop.xlane.xlu0 %551
    %553 = vadd.xlane.f32.xlu0 %v522
    %v554 = vpop.xlane.xlu0 %553
    %555 = vadd.xlane.f32.xlu0 %v524
    %v556 = vpop.xlane.xlu0 %555
    %557 = vadd.xlane.f32.xlu0 %v526
    %v558 = vpop.xlane.xlu0 %557
    %559 = vadd.xlane.f32.xlu0 %v528
    %v560 = vpop.xlane.xlu0 %559
    %561 = vadd.xlane.f32.xlu0 %v530
    %v562 = vpop.xlane.xlu0 %561
    %563 = vadd.xlane.f32.xlu0 %v532
    %v564 = vpop.xlane.xlu0 %563
    %565 = vadd.xlane.f32.xlu0 %v534
    %v566 = vpop.xlane.xlu0 %565
    %567 = vadd.xlane.f32.xlu0 %v536
    %v568 = vpop.xlane.xlu0 %567
    %569 = vadd.xlane.f32.xlu0 %v538
    %v570 = vpop.xlane.xlu0 %569
    %571 = vadd.xlane.f32.xlu0 %v540
    %v572 = vpop.xlane.xlu0 %571
    %573 = vadd.xlane.f32.xlu0 %v542
    %v574 = vpop.xlane.xlu0 %573
    %575 = vadd.xlane.f32.xlu0 %v544
    %v576 = vpop.xlane.xlu0 %575
    %577 = vadd.xlane.f32.xlu0 %v546
    %v578 = vpop.xlane.xlu0 %577
    %v579 = vrcp.pop %v548
    %v580 = vrcp.pop %v550
    %v581 = vrcp.pop %v552
    %v582 = vrcp.pop %v554
    %v583 = vrcp.pop %v556
    %v584 = vrcp.pop %v558
    %v585 = vrcp.pop %v560
    %v586 = vrcp.pop %v562
    %v587 = vrcp.pop %v564
    %v588 = vrcp.pop %v566
    %v589 = vrcp.pop %v568
    %v590 = vrcp.pop %v570
    %v591 = vrcp.pop %v572
    %v592 = vrcp.pop %v574
    %v593 = vrcp.pop %v576
    %v594 = vrcp.pop %v578
    %v595 = vmul.f32 %v516, %v579
    %v596 = vmul.f32 %v518, %v580
    %v597 = vmul.f32 %v520, %v581
    %v598 = vmul.f32 %v522, %v582
    %v599 = vmul.f32 %v524, %v583
    %v600 = vmul.f32 %v526, %v584
    %v601 = vmul.f32 %v528, %v585
    %v602 = vmul.f32 %v530, %v586
    %v603 = vmul.f32 %v532, %v587
    %v604 = vmul.f32 %v534, %v588
    %v605 = vmul.f32 %v536, %v589
    %v606 = vmul.f32 %v538, %v590
    %v607 = vmul.f32 %v540, %v591
    %v608 = vmul.f32 %v542, %v592
    %v609 = vmul.f32 %v544, %v593
    %v610 = vmul.f32 %v546, %v594
    %611 = vst [vmem:[#allocation2] sm:$0xff] %v595
    %612 = vst [vmem:[#allocation2 + $0x8] sm:$0xff] %v596
    %613 = vst [vmem:[#allocation2 + $0x10] sm:$0xff] %v597
    %614 = vst [vmem:[#allocation2 + $0x18] sm:$0xff] %v598
    %615 = vst [vmem:[#allocation2 + $0x20] sm:$0xff] %v599
    %616 = vst [vmem:[#allocation2 + $0x28] sm:$0xff] %v600
    %617 = vst [vmem:[#allocation2 + $0x30] sm:$0xff] %v601
    %618 = vst [vmem:[#allocation2 + $0x38] sm:$0xff] %v602
    %619 = vst [vmem:[#allocation2 + $0x40] sm:$0xff] %v603
    %620 = vst [vmem:[#allocation2 + $0x48] sm:$0xff] %v604
    %621 = vst [vmem:[#allocation2 + $0x50] sm:$0xff] %v605
    %622 = vst [vmem:[#allocation2 + $0x58] sm:$0xff] %v606
    %623 = vst [vmem:[#allocation2 + $0x60] sm:$0xff] %v607
    %624 = vst [vmem:[#allocation2 + $0x68] sm:$0xff] %v608
    %625 = vst [vmem:[#allocation2 + $0x70] sm:$0xff] %v609
    %626 = vst [vmem:[#allocation2 + $0x78] sm:$0xff] %v610
    // Predicated region
    $region22: #{tpu_custom_call.1} parent=1 // pred_check
      _
    $region23: #{tpu_custom_call.1} parent=1 // pred_check_branch
      %628 = sbr.rel (0) target = $region25
    $region24: #{tpu_custom_call.1} parent=1 // pred_region
      %s630 = ssub.s32 2048, 2048
      %631 = vsyncadd [#allocation3], %s630
      %s632 = sshll.u32 [#allocation2], 4
      %s633 = int_to_ptr.vmem [resolvable:$true] %s632
      %638 = dma.vmem_to_hbm [thread:$0]  %s633, 2048, %s5, [#allocation3], 128, 128, 8
    $region25: #{tpu_custom_call.1} parent=1 // pred_fallthru
      _
    // Predicated region
    $region26: #{tpu_custom_call.1} parent=1 // pred_check
      _
    $region27: #{tpu_custom_call.1} parent=1 // pred_check_branch
      %640 = sbr.rel (0) target = $region29
    $region28: #{tpu_custom_call.1} parent=1 // pred_region
      %641 = dma.done [#allocation3], 2048
    $region29: #{tpu_custom_call.1} parent=1 // pred_fallthru
      _
    %642 = vsyncpa [#allocation3], 1

</llo_original>
